<compile_context>
chip_gen: v5e
topology: v5e:2x2
jax: 0.10.0
libtpu: 0.0.40
codegen_flags: <defaults>
</compile_context>

<pallas_src>
import functools

import jax
import jax.numpy as jnp
from jax.experimental import pallas as pl
from jax.experimental.pallas import tpu as pltpu


# Dimensions used inside the kernel (lane-padded where it is cheap).
_K_IN = 784      # contraction dim of fc1, streamed un-padded
_H1 = 256        # already a multiple of 128
_H2 = 128        # 64  -> 128
_H3 = 128        # 32  -> 128
_N_OUT = 128     # n_classes -> 128 (lane-dense output stores)


def _mlp_kernel(x_ref, w1_ref, b1_ref, w2_ref, b2_ref, w3_ref, b3_ref,
                wc_ref, bc_ref, o_ref):
    # fc1 + relu  (bf16 operands, f32 accumulate, f32 bias)
    h = jnp.dot(x_ref[...], w1_ref[...], preferred_element_type=jnp.float32)
    h = jnp.maximum(h + b1_ref[...], 0.0).astype(jnp.bfloat16)
    # dropout (eval mode) -> identity
    # fc2 + relu
    h = jnp.dot(h, w2_ref[...], preferred_element_type=jnp.float32)
    h = jnp.maximum(h + b2_ref[...], 0.0).astype(jnp.bfloat16)
    # dropout (eval mode) -> identity
    # fc3 + relu
    h = jnp.dot(h, w3_ref[...], preferred_element_type=jnp.float32)
    h = jnp.maximum(h + b3_ref[...], 0.0).astype(jnp.bfloat16)
    # classifier head (no activation), keep f32 output
    out = jnp.dot(h, wc_ref[...], preferred_element_type=jnp.float32) + bc_ref[...]
    o_ref[...] = out.astype(o_ref.dtype)


def _round_up(x, m):
    return ((x + m - 1) // m) * m


def _pad2d(a, rows, cols):
    return jnp.pad(a, ((0, rows - a.shape[0]), (0, cols - a.shape[1])))


def _choose_batch_tile(b, batch_tile):
    """Pick a legal, efficient batch tile (second-to-last block dim)."""
    # Clamp/validate user tile: at least 256 and a multiple of 256.
    batch_tile = max(256, _round_up(int(batch_tile), 256))
    if b >= 512:
        # Ensure >= 2 grid steps so the "parallel" batch axis can shard across
        # v7x's two TensorCores (no-op on single-TC v5e/v6e).  Floor to a 256
        # multiple to avoid over-padding mid-sized batches.
        half = max(256, (b // 2) // 256 * 256)
        return min(batch_tile, half)
    # Small batches: a single tile, padded only to the bf16 sublane granule.
    return _round_up(b, 16)


def prepare_params(params):
    """Pad to lane multiples and cast weights to bf16 ONCE, outside the hot path.

    Returns (prepared_params, n_classes).
    """
    w1, b1, w2, b2, w3, b3, wc, bc = params
    n_classes = wc.shape[1]
    w1p = w1.astype(jnp.bfloat16)                           # (784, 256)
    b1p = b1.astype(jnp.float32)                            # (1, 256)
    w2p = _pad2d(w2, _H1, _H2).astype(jnp.bfloat16)         # (256, 128)
    b2p = _pad2d(b2, 1, _H2).astype(jnp.float32)            # (1, 128)
    w3p = _pad2d(w3, _H2, _H3).astype(jnp.bfloat16)         # (128, 128)
    b3p = _pad2d(b3, 1, _H3).astype(jnp.float32)            # (1, 128)
    wcp = _pad2d(wc, _H3, _N_OUT).astype(jnp.bfloat16)      # (128, 128)
    bcp = _pad2d(bc, 1, _N_OUT).astype(jnp.float32)         # (1, 128)
    return (w1p, b1p, w2p, b2p, w3p, b3p, wcp, bcp), n_classes


@functools.partial(jax.jit, static_argnames=("n_classes", "batch_tile"))
def mlp_forward(x, prepared, n_classes=10, batch_tile=1024):
    """x: any shape whose trailing elements flatten to (B, 784), float32/bfloat16."""
    x2d = x.reshape(-1, _K_IN)
    b = x2d.shape[0]

    bt = _choose_batch_tile(b, batch_tile)
    b_pad = _round_up(b, bt)

    # Cast the streamed operand to bf16; only pad the (sublane) batch dim if needed.
    x2d = x2d.astype(jnp.bfloat16)
    if b_pad != b:
        x2d = jnp.pad(x2d, ((0, b_pad - b), (0, 0)))

    w1p, b1p, w2p, b2p, w3p, b3p, wcp, bcp = prepared

    grid = (b_pad // bt,)

    def _rep(shape):  # grid-invariant weight / bias blocks (stay VMEM-resident)
        return pl.BlockSpec(shape, lambda i: tuple(0 for _ in shape))

    flops = 2 * b_pad * (_K_IN * _H1 + _H1 * _H2 + _H2 * _H3 + _H3 * _N_OUT)
    w_bytes = 2 * (_K_IN * _H1 + _H1 * _H2 + _H2 * _H3 + _H3 * _N_OUT) \
              + 4 * (_H1 + _H2 + _H3 + _N_OUT)
    bytes_accessed = 2 * b_pad * _K_IN + w_bytes + 4 * b_pad * _N_OUT

    out = pl.pallas_call(
        _mlp_kernel,
        out_shape=jax.ShapeDtypeStruct((b_pad, _N_OUT), jnp.float32),
        grid_spec=pltpu.PrefetchScalarGridSpec(
            num_scalar_prefetch=0,
            grid=grid,
            in_specs=[
                pl.BlockSpec((bt, _K_IN), lambda i: (i, 0)),  # x tile (784 = full dim)
                _rep(w1p.shape), _rep(b1p.shape),
                _rep(w2p.shape), _rep(b2p.shape),
                _rep(w3p.shape), _rep(b3p.shape),
                _rep(wcp.shape), _rep(bcp.shape),
            ],
            out_specs=pl.BlockSpec((bt, _N_OUT), lambda i: (i, 0)),
        ),
        compiler_params=pltpu.CompilerParams(
            dimension_semantics=("parallel",),
            vmem_limit_bytes=32 * 1024 * 1024),
        cost_estimate=pl.CostEstimate(
            flops=flops, transcendentals=0, bytes_accessed=bytes_accessed),
    )(x2d, w1p, b1p, w2p, b2p, w3p, b3p, wcp, bcp)

    # Drop batch padding and the padded classifier columns.
    return out[:b, :n_classes]


def init_params(key, n_classes=10):
    """Deterministic init mirroring nn.Linear default (U[-1/sqrt(fan_in), 1/sqrt(fan_in)]).

    Weights are stored transposed: (in_features, out_features).
    Biases are stored as (1, out_features) for 2-D TPU layout.
    """
    dims = [(784, 256), (256, 64), (64, 32), (32, n_classes)]
    params = []
    for (fan_in, fan_out) in dims:
        key, kw, kb = jax.random.split(key, 3)
        bound = 1.0 / jnp.sqrt(float(fan_in))
        w = jax.random.uniform(kw, (fan_in, fan_out), jnp.float32, -bound, bound)
        b = jax.random.uniform(kb, (1, fan_out), jnp.float32, -bound, bound)
        params += [w, b]
    return tuple(params)


def mlp_reference(x, params):
    """Pure-JAX f32 reference for correctness checking."""
    w1, b1, w2, b2, w3, b3, wc, bc = params
    h = x.reshape(-1, 784)
    h = jnp.maximum(h @ w1 + b1, 0.0)
    h = jnp.maximum(h @ w2 + b2, 0.0)
    h = jnp.maximum(h @ w3 + b3, 0.0)
    return h @ wc + bc


if __name__ == "__main__":
    key = jax.random.PRNGKey(0)
    k_param, k_x = jax.random.split(key)

    n_classes = 10
    params = init_params(k_param, n_classes=n_classes)
    prepared, n_cls = prepare_params(params)   # pad + bf16-cast weights once

    # MNIST-like NCHW input: (batch=2, channels=1, 28, 28) -> flattens to (2, 784)
    x = jax.random.normal(k_x, (2, 1, 28, 28), dtype=jnp.float32)

    out = mlp_forward(x, prepared, n_classes=n_cls)
    out = jax.block_until_ready(out)

    ref = mlp_reference(x, params)
    assert out.shape == (2, n_classes), out.shape
    # bf16 operands / f32 accumulation: expect ~1e-3-level absolute error vs f32 ref.
    max_err = jnp.max(jnp.abs(out - ref))
    assert jnp.allclose(out, ref, atol=3e-2, rtol=3e-2), f"max abs err {max_err}"

    print("KERNEL_OK")
</pallas_src>

<mosaic_0001>
module attributes {stable_mosaic.version = 11 : i64} {
  func.func @_mlp_kernel(%arg0: i32, %arg1: memref<16x784xbf16, #tpu.memory_space<vmem>>, %arg2: memref<784x256xbf16, #tpu.memory_space<vmem>>, %arg3: memref<1x256xf32, #tpu.memory_space<vmem>>, %arg4: memref<256x128xbf16, #tpu.memory_space<vmem>>, %arg5: memref<1x128xf32, #tpu.memory_space<vmem>>, %arg6: memref<128x128xbf16, #tpu.memory_space<vmem>>, %arg7: memref<1x128xf32, #tpu.memory_space<vmem>>, %arg8: memref<128x128xbf16, #tpu.memory_space<vmem>>, %arg9: memref<1x128xf32, #tpu.memory_space<vmem>>, %arg10: memref<16x128xf32, #tpu.memory_space<vmem>>) attributes {dimension_semantics = [#tpu.dimension_semantics<parallel>], iteration_bounds = array<i64: 1>, scalar_prefetch = 0 : i64, scratch_operands = 0 : i64, tpu.core_type = #tpu.core_type<tc>, window_params = [{transform_indices = @transform_0, window_bounds = array<i64: 16, 784>}, {pipeline_mode = #tpu.pipeline_mode<synchronous>, transform_indices = @transform_1, window_bounds = array<i64: 784, 256>}, {pipeline_mode = #tpu.pipeline_mode<synchronous>, transform_indices = @transform_2, window_bounds = array<i64: 1, 256>}, {pipeline_mode = #tpu.pipeline_mode<synchronous>, transform_indices = @transform_3, window_bounds = array<i64: 256, 128>}, {pipeline_mode = #tpu.pipeline_mode<synchronous>, transform_indices = @transform_4, window_bounds = array<i64: 1, 128>}, {pipeline_mode = #tpu.pipeline_mode<synchronous>, transform_indices = @transform_5, window_bounds = array<i64: 128, 128>}, {pipeline_mode = #tpu.pipeline_mode<synchronous>, transform_indices = @transform_6, window_bounds = array<i64: 1, 128>}, {pipeline_mode = #tpu.pipeline_mode<synchronous>, transform_indices = @transform_7, window_bounds = array<i64: 128, 128>}, {pipeline_mode = #tpu.pipeline_mode<synchronous>, transform_indices = @transform_8, window_bounds = array<i64: 1, 128>}, {transform_indices = @transform_9, window_bounds = array<i64: 16, 128>}]} {
    %c0 = arith.constant 0 : index
    %c0_0 = arith.constant 0 : index
    %0 = vector.load %arg1[%c0, %c0_0] : memref<16x784xbf16, #tpu.memory_space<vmem>>, vector<16x784xbf16>
    %c0_1 = arith.constant 0 : index
    %c0_2 = arith.constant 0 : index
    %1 = vector.load %arg2[%c0_1, %c0_2] : memref<784x256xbf16, #tpu.memory_space<vmem>>, vector<784x256xbf16>
    %cst = arith.constant dense<0.000000e+00> : vector<16x256xf32>
    %2 = tpu.matmul %0, %1, %cst {dimension_numbers = #tpu.dot_dimension_numbers<[1], [0], [0], [1], [0, 0, 1, 1], [], []>} : vector<16x784xbf16>, vector<784x256xbf16>, vector<16x256xf32> -> vector<16x256xf32>
    %c0_3 = arith.constant 0 : index
    %c0_4 = arith.constant 0 : index
    %3 = vector.load %arg3[%c0_3, %c0_4] : memref<1x256xf32, #tpu.memory_space<vmem>>, vector<1x256xf32>
    %4 = vector.broadcast %3 : vector<1x256xf32> to vector<16x256xf32>
    %5 = arith.addf %2, %4 : vector<16x256xf32>
    %cst_5 = arith.constant 0.000000e+00 : f32
    %6 = vector.broadcast %cst_5 : f32 to vector<16x256xf32>
    %7 = arith.maximumf %5, %6 : vector<16x256xf32>
    %8 = arith.truncf %7 : vector<16x256xf32> to vector<16x256xbf16>
    %c0_6 = arith.constant 0 : index
    %c0_7 = arith.constant 0 : index
    %9 = vector.load %arg4[%c0_6, %c0_7] : memref<256x128xbf16, #tpu.memory_space<vmem>>, vector<256x128xbf16>
    %cst_8 = arith.constant dense<0.000000e+00> : vector<16x128xf32>
    %10 = tpu.matmul %8, %9, %cst_8 {dimension_numbers = #tpu.dot_dimension_numbers<[1], [0], [0], [1], [0, 0, 1, 1], [], []>} : vector<16x256xbf16>, vector<256x128xbf16>, vector<16x128xf32> -> vector<16x128xf32>
    %c0_9 = arith.constant 0 : index
    %c0_10 = arith.constant 0 : index
    %11 = vector.load %arg5[%c0_9, %c0_10] : memref<1x128xf32, #tpu.memory_space<vmem>>, vector<1x128xf32>
    %12 = vector.broadcast %11 : vector<1x128xf32> to vector<16x128xf32>
    %13 = arith.addf %10, %12 : vector<16x128xf32>
    %cst_11 = arith.constant 0.000000e+00 : f32
    %14 = vector.broadcast %cst_11 : f32 to vector<16x128xf32>
    %15 = arith.maximumf %13, %14 : vector<16x128xf32>
    %16 = arith.truncf %15 : vector<16x128xf32> to vector<16x128xbf16>
    %c0_12 = arith.constant 0 : index
    %c0_13 = arith.constant 0 : index
    %17 = vector.load %arg6[%c0_12, %c0_13] : memref<128x128xbf16, #tpu.memory_space<vmem>>, vector<128x128xbf16>
    %cst_14 = arith.constant dense<0.000000e+00> : vector<16x128xf32>
    %18 = tpu.matmul %16, %17, %cst_14 {dimension_numbers = #tpu.dot_dimension_numbers<[1], [0], [0], [1], [0, 0, 1, 1], [], []>} : vector<16x128xbf16>, vector<128x128xbf16>, vector<16x128xf32> -> vector<16x128xf32>
    %c0_15 = arith.constant 0 : index
    %c0_16 = arith.constant 0 : index
    %19 = vector.load %arg7[%c0_15, %c0_16] : memref<1x128xf32, #tpu.memory_space<vmem>>, vector<1x128xf32>
    %20 = vector.broadcast %19 : vector<1x128xf32> to vector<16x128xf32>
    %21 = arith.addf %18, %20 : vector<16x128xf32>
    %cst_17 = arith.constant 0.000000e+00 : f32
    %22 = vector.broadcast %cst_17 : f32 to vector<16x128xf32>
    %23 = arith.maximumf %21, %22 : vector<16x128xf32>
    %24 = arith.truncf %23 : vector<16x128xf32> to vector<16x128xbf16>
    %c0_18 = arith.constant 0 : index
    %c0_19 = arith.constant 0 : index
    %25 = vector.load %arg8[%c0_18, %c0_19] : memref<128x128xbf16, #tpu.memory_space<vmem>>, vector<128x128xbf16>
    %cst_20 = arith.constant dense<0.000000e+00> : vector<16x128xf32>
    %26 = tpu.matmul %24, %25, %cst_20 {dimension_numbers = #tpu.dot_dimension_numbers<[1], [0], [0], [1], [0, 0, 1, 1], [], []>} : vector<16x128xbf16>, vector<128x128xbf16>, vector<16x128xf32> -> vector<16x128xf32>
    %c0_21 = arith.constant 0 : index
    %c0_22 = arith.constant 0 : index
    %27 = vector.load %arg9[%c0_21, %c0_22] : memref<1x128xf32, #tpu.memory_space<vmem>>, vector<1x128xf32>
    %28 = vector.broadcast %27 : vector<1x128xf32> to vector<16x128xf32>
    %29 = arith.addf %26, %28 : vector<16x128xf32>
    %c0_23 = arith.constant 0 : index
    %c0_24 = arith.constant 0 : index
    %30 = vector.load %arg10[%c0_23, %c0_24] : memref<16x128xf32, #tpu.memory_space<vmem>>, vector<16x128xf32>
    tpu.vector_store %arg10[%c0_23, %c0_24], %29 {strides = array<i32>} : memref<16x128xf32, #tpu.memory_space<vmem>>, vector<16x128xf32>,
    return
  }
  func.func @transform_0(%arg0: i32) -> (i32, i32) {
    %c0_i32 = arith.constant 0 : i32
    %c0_i32_0 = arith.constant 0 : i32
    return %arg0, %c0_i32 : i32, i32
  }
  func.func @transform_1(%arg0: i32) -> (i32, i32) {
    %c0_i32 = arith.constant 0 : i32
    %c0_i32_0 = arith.constant 0 : i32
    %c0_i32_1 = arith.constant 0 : i32
    return %c0_i32, %c0_i32_0 : i32, i32
  }
  func.func @transform_2(%arg0: i32) -> (i32, i32) {
    %c0_i32 = arith.constant 0 : i32
    %c0_i32_0 = arith.constant 0 : i32
    %c0_i32_1 = arith.constant 0 : i32
    return %c0_i32, %c0_i32_0 : i32, i32
  }
  func.func @transform_3(%arg0: i32) -> (i32, i32) {
    %c0_i32 = arith.constant 0 : i32
    %c0_i32_0 = arith.constant 0 : i32
    %c0_i32_1 = arith.constant 0 : i32
    return %c0_i32, %c0_i32_0 : i32, i32
  }
  func.func @transform_4(%arg0: i32) -> (i32, i32) {
    %c0_i32 = arith.constant 0 : i32
    %c0_i32_0 = arith.constant 0 : i32
    %c0_i32_1 = arith.constant 0 : i32
    return %c0_i32, %c0_i32_0 : i32, i32
  }
  func.func @transform_5(%arg0: i32) -> (i32, i32) {
    %c0_i32 = arith.constant 0 : i32
    %c0_i32_0 = arith.constant 0 : i32
    %c0_i32_1 = arith.constant 0 : i32
    return %c0_i32, %c0_i32_0 : i32, i32
  }
  func.func @transform_6(%arg0: i32) -> (i32, i32) {
    %c0_i32 = arith.constant 0 : i32
    %c0_i32_0 = arith.constant 0 : i32
    %c0_i32_1 = arith.constant 0 : i32
    return %c0_i32, %c0_i32_0 : i32, i32
  }
  func.func @transform_7(%arg0: i32) -> (i32, i32) {
    %c0_i32 = arith.constant 0 : i32
    %c0_i32_0 = arith.constant 0 : i32
    %c0_i32_1 = arith.constant 0 : i32
    return %c0_i32, %c0_i32_0 : i32, i32
  }
  func.func @transform_8(%arg0: i32) -> (i32, i32) {
    %c0_i32 = arith.constant 0 : i32
    %c0_i32_0 = arith.constant 0 : i32
    %c0_i32_1 = arith.constant 0 : i32
    return %c0_i32, %c0_i32_0 : i32, i32
  }
  func.func @transform_9(%arg0: i32) -> (i32, i32) {
    %c0_i32 = arith.constant 0 : i32
    %c0_i32_0 = arith.constant 0 : i32
    return %arg0, %c0_i32 : i32, i32
  }
}

</mosaic_0001>

<llo_original>
// kernel: mlp_forward.1
$region0: #{mlp_forward.1}
  #allocation0 [shape = 'u32[]', space=smem, size = 0x4, offset = 0x4, fixed_abs, tag = 'smem constant byte address 0x4 - core index']
  #allocation1 [shape = 'u32[72,128]{1,0:T(1,128)}', space=vmem, size = 0x9000, scoped, tag = 'internal scratch']
  %s0 = inlined_call_operand.vmem [shape: bf16[16,784], index: 0, kind: input, shape index: {}]
  %s1 = inlined_call_operand.hbm [shape: bf16[784,256], index: 1, kind: input, shape index: {}]
  %s2 = inlined_call_operand.hbm [shape: f32[1,256], index: 2, kind: input, shape index: {}]
  %s3 = inlined_call_operand.vmem [shape: bf16[256,128], index: 3, kind: input, shape index: {}]
  %s4 = inlined_call_operand.vmem [shape: f32[1,128], index: 4, kind: input, shape index: {}]
  %s5 = inlined_call_operand.vmem [shape: bf16[128,128], index: 5, kind: input, shape index: {}]
  %s6 = inlined_call_operand.vmem [shape: f32[1,128], index: 6, kind: input, shape index: {}]
  %s7 = inlined_call_operand.hbm [shape: bf16[128,128], index: 7, kind: input, shape index: {}]
  %s8 = inlined_call_operand.vmem [shape: f32[1,128], index: 8, kind: input, shape index: {}]
  %s9 = inlined_call_operand.vmem [shape: f32[16,128], index: 9, kind: output, shape index: {}]
  %s10 = sld [smem:[#allocation0]]
  $region58: #{mlp_forward.1} parent=0
    _
  %s12 = ssub.s32 1, %s10
  %s13 = scalar_select 0, %s12, %s10
  $region1: #{mlp_forward.1} parent=0
    #allocation2 [shape = 'u8[401408]{0}', space=vmem, size = 0x62000, scoped, tag = 'input window, operand 1, single buffered']
    #allocation3 [shape = 's32[1]{0}', space=sflag, size = 0x4, scoped, tag = 'scoped memory for mlp_forward.1']
    #allocation4 [shape = 'u8[1024]{0}', space=vmem, size = 0x400, scoped, tag = 'input window, operand 2, single buffered']
    #allocation5 [shape = 's32[1]{0}', space=sflag, size = 0x4, scoped, tag = 'scoped memory for mlp_forward.1']
    #allocation6 [shape = 'u8[32768]{0}', space=vmem, size = 0x8000, scoped, tag = 'input window, operand 7, single buffered']
    %14 = vsyncpa [#allocation3], 0
    %15 = vsyncpa [#allocation5], 0
    // Predicated region
    $region2: #{mlp_forward.1} parent=1 // pred_check
      _
    $region3: #{mlp_forward.1} parent=1 // pred_check_branch
      %17 = sbr.rel (0) target = $region5
    $region4: #{mlp_forward.1} parent=1 // pred_region
      _
    $region5: #{mlp_forward.1} parent=1 // pred_fallthru
      _
    // Predicated region
    $region6: #{mlp_forward.1} parent=1 // pred_check
      _
    $region7: #{mlp_forward.1} parent=1 // pred_check_branch
      %19 = sbr.rel (0) target = $region9
    $region8: #{mlp_forward.1} parent=1 // pred_region
      %21 = vsyncadd [#allocation3], 0
      %s22 = sshll.u32 %s1, 4
      %s23 = int_to_ptr.hbm [resolvable:$true] %s22
      %s24 = sshll.u32 [#allocation2], 4
      %s25 = int_to_ptr.vmem [resolvable:$true] %s24
      %30 = dma.hbm_to_vmem [thread:$0]  %s23, 12544, %s25, [#allocation3], 128, 128, 8
    $region9: #{mlp_forward.1} parent=1 // pred_fallthru
      _
    // Predicated region
    $region10: #{mlp_forward.1} parent=1 // pred_check
      _
    $region11: #{mlp_forward.1} parent=1 // pred_check_branch
      %32 = sbr.rel (0) target = $region13
    $region12: #{mlp_forward.1} parent=1 // pred_region
      %34 = vsyncadd [#allocation5], 0
      %s36 = sshll.u32 %s2, 4
      %s37 = int_to_ptr.hbm [resolvable:$true] %s36
      %s38 = sshll.u32 [#allocation4], 4
      %s39 = int_to_ptr.vmem [resolvable:$true] %s38
      %41 = dma.hbm_to_vmem [thread:$0]  %s37, 32, %s39, [#allocation5]
    $region13: #{mlp_forward.1} parent=1 // pred_fallthru
      _
    // Predicated region
    $region14: #{mlp_forward.1} parent=1 // pred_check
      _
    $region15: #{mlp_forward.1} parent=1 // pred_check_branch
      %43 = sbr.rel (0) target = $region17
    $region16: #{mlp_forward.1} parent=1 // pred_region
      _
    $region17: #{mlp_forward.1} parent=1 // pred_fallthru
      _
    // Predicated region
    $region18: #{mlp_forward.1} parent=1 // pred_check
      _
    $region19: #{mlp_forward.1} parent=1 // pred_check_branch
      %45 = sbr.rel (0) target = $region21
    $region20: #{mlp_forward.1} parent=1 // pred_region
      _
    $region21: #{mlp_forward.1} parent=1 // pred_fallthru
      _
    // Predicated region
    $region22: #{mlp_forward.1} parent=1 // pred_check
      _
    $region23: #{mlp_forward.1} parent=1 // pred_check_branch
      %47 = sbr.rel (0) target = $region25
    $region24: #{mlp_forward.1} parent=1 // pred_region
      _
    $region25: #{mlp_forward.1} parent=1 // pred_fallthru
      _
    // Predicated region
    $region26: #{mlp_forward.1} parent=1 // pred_check
      _
    $region27: #{mlp_forward.1} parent=1 // pred_check_branch
      %49 = sbr.rel (0) target = $region29
    $region28: #{mlp_forward.1} parent=1 // pred_region
      _
    $region29: #{mlp_forward.1} parent=1 // pred_fallthru
      _
    // Predicated region
    $region30: #{mlp_forward.1} parent=1 // pred_check
      _
    $region31: #{mlp_forward.1} parent=1 // pred_check_branch
      %51 = sbr.rel (0) target = $region33
    $region32: #{mlp_forward.1} parent=1 // pred_region
      %53 = vsyncadd [#allocation5], 0
      %s54 = sshll.u32 %s7, 4
      %s55 = int_to_ptr.hbm [resolvable:$true] %s54
      %s56 = sshll.u32 [#allocation6], 4
      %s57 = int_to_ptr.vmem [resolvable:$true] %s56
      %62 = dma.hbm_to_vmem [thread:$0]  %s55, 1024, %s57, [#allocation5], 64, 64, 4
    $region33: #{mlp_forward.1} parent=1 // pred_fallthru
      _
    // Predicated region
    $region34: #{mlp_forward.1} parent=1 // pred_check
      _
    $region35: #{mlp_forward.1} parent=1 // pred_check_branch
      %64 = sbr.rel (0) target = $region37
    $region36: #{mlp_forward.1} parent=1 // pred_region
      _
    $region37: #{mlp_forward.1} parent=1 // pred_fallthru
      _
    // Predicated region
    $region38: #{mlp_forward.1} parent=1 // pred_check
      _
    $region39: #{mlp_forward.1} parent=1 // pred_check_branch
      %66 = sbr.rel (0) target = $region41
    $region40: #{mlp_forward.1} parent=1 // pred_region
      %68 = dma.done [#allocation3], 12544
    $region41: #{mlp_forward.1} parent=1 // pred_fallthru
      _
    // Predicated region
    $region42: #{mlp_forward.1} parent=1 // pred_check
      _
    $region43: #{mlp_forward.1} parent=1 // pred_check_branch
      %70 = sbr.rel (0) target = $region45
    $region44: #{mlp_forward.1} parent=1 // pred_region
      %72 = dma.done [#allocation5], 32
    $region45: #{mlp_forward.1} parent=1 // pred_fallthru
      _
    // Predicated region
    $region46: #{mlp_forward.1} parent=1 // pred_check
      _
    $region47: #{mlp_forward.1} parent=1 // pred_check_branch
      %74 = sbr.rel (0) target = $region49
    $region48: #{mlp_forward.1} parent=1 // pred_region
      %76 = dma.done [#allocation5], 1024
    $region49: #{mlp_forward.1} parent=1 // pred_fallthru
      _
    %v78 = vld [vmem:[%s0] sm:$0xff]
    %v79 = vld [vmem:[%s0 + $0x8] sm:$0xff]
    %v80 = vld [vmem:[%s0 + $0x10] sm:$0xff]
    %v81 = vld [vmem:[%s0 + $0x18] sm:$0xf]
    %v82 = vld [vmem:[%s0 + $0x1c] sm:$0xff]
    %v83 = vld [vmem:[%s0 + $0x24] sm:$0xff]
    %v84 = vld [vmem:[%s0 + $0x2c] sm:$0xff]
    %v85 = vld [vmem:[%s0 + $0x34] sm:$0xf]
    %v86 = vld [vmem:[#allocation2] sm:$0xff]
    %v87 = vld [vmem:[#allocation2 + $0x8] sm:$0xff]
    %v88 = vld [vmem:[#allocation2 + $0x10] sm:$0xff]
    %v89 = vld [vmem:[#allocation2 + $0x18] sm:$0xff]
    %v90 = vld [vmem:[#allocation2 + $0x20] sm:$0xff]
    %v91 = vld [vmem:[#allocation2 + $0x28] sm:$0xff]
    %v92 = vld [vmem:[#allocation2 + $0x30] sm:$0xff]
    %v93 = vld [vmem:[#allocation2 + $0x38] sm:$0xff]
    %v94 = vld [vmem:[#allocation2 + $0x40] sm:$0xff]
    %v95 = vld [vmem:[#allocation2 + $0x48] sm:$0xff]
    %v96 = vld [vmem:[#allocation2 + $0x50] sm:$0xff]
    %v97 = vld [vmem:[#allocation2 + $0x58] sm:$0xff]
    %v98 = vld [vmem:[#allocation2 + $0x60] sm:$0xff]
    %v99 = vld [vmem:[#allocation2 + $0x68] sm:$0xff]
    %v100 = vld [vmem:[#allocation2 + $0x70] sm:$0xff]
    %v101 = vld [vmem:[#allocation2 + $0x78] sm:$0xff]
    %v102 = vld [vmem:[#allocation2 + $0x80] sm:$0xff]
    %v103 = vld [vmem:[#allocation2 + $0x88] sm:$0xff]
    %v104 = vld [vmem:[#allocation2 + $0x90] sm:$0xff]
    %v105 = vld [vmem:[#allocation2 + $0x98] sm:$0xff]
    %v106 = vld [vmem:[#allocation2 + $0xa0] sm:$0xff]
    %v107 = vld [vmem:[#allocation2 + $0xa8] sm:$0xff]
    %v108 = vld [vmem:[#allocation2 + $0xb0] sm:$0xff]
    %v109 = vld [vmem:[#allocation2 + $0xb8] sm:$0xff]
    %v110 = vld [vmem:[#allocation2 + $0xc0] sm:$0xff]
    %v111 = vld [vmem:[#allocation2 + $0xc8] sm:$0xff]
    %v112 = vld [vmem:[#allocation2 + $0xd0] sm:$0xff]
    %v113 = vld [vmem:[#allocation2 + $0xd8] sm:$0xff]
    %v114 = vld [vmem:[#allocation2 + $0xe0] sm:$0xff]
    %v115 = vld [vmem:[#allocation2 + $0xe8] sm:$0xff]
    %v116 = vld [vmem:[#allocation2 + $0xf0] sm:$0xff]
    %v117 = vld [vmem:[#allocation2 + $0xf8] sm:$0xff]
    %v118 = vld [vmem:[#allocation2 + $0x100] sm:$0xff]
    %v119 = vld [vmem:[#allocation2 + $0x108] sm:$0xff]
    %v120 = vld [vmem:[#allocation2 + $0x110] sm:$0xff]
    %v121 = vld [vmem:[#allocation2 + $0x118] sm:$0xff]
    %v122 = vld [vmem:[#allocation2 + $0x120] sm:$0xff]
    %v123 = vld [vmem:[#allocation2 + $0x128] sm:$0xff]
    %v124 = vld [vmem:[#allocation2 + $0x130] sm:$0xff]
    %v125 = vld [vmem:[#allocation2 + $0x138] sm:$0xff]
    %v126 = vld [vmem:[#allocation2 + $0x140] sm:$0xff]
    %v127 = vld [vmem:[#allocation2 + $0x148] sm:$0xff]
    %v128 = vld [vmem:[#allocation2 + $0x150] sm:$0xff]
    %v129 = vld [vmem:[#allocation2 + $0x158] sm:$0xff]
    %v130 = vld [vmem:[#allocation2 + $0x160] sm:$0xff]
    %v131 = vld [vmem:[#allocation2 + $0x168] sm:$0xff]
    %v132 = vld [vmem:[#allocation2 + $0x170] sm:$0xff]
    %v133 = vld [vmem:[#allocation2 + $0x178] sm:$0xff]
    %v134 = vld [vmem:[#allocation2 + $0x180] sm:$0xff]
    %v135 = vld [vmem:[#allocation2 + $0x188] sm:$0xff]
    %v136 = vld [vmem:[#allocation2 + $0x190] sm:$0xff]
    %v137 = vld [vmem:[#allocation2 + $0x198] sm:$0xff]
    %v138 = vld [vmem:[#allocation2 + $0x1a0] sm:$0xff]
    %v139 = vld [vmem:[#allocation2 + $0x1a8] sm:$0xff]
    %v140 = vld [vmem:[#allocation2 + $0x1b0] sm:$0xff]
    %v141 = vld [vmem:[#allocation2 + $0x1b8] sm:$0xff]
    %v142 = vld [vmem:[#allocation2 + $0x1c0] sm:$0xff]
    %v143 = vld [vmem:[#allocation2 + $0x1c8] sm:$0xff]
    %v144 = vld [vmem:[#allocation2 + $0x1d0] sm:$0xff]
    %v145 = vld [vmem:[#allocation2 + $0x1d8] sm:$0xff]
    %v146 = vld [vmem:[#allocation2 + $0x1e0] sm:$0xff]
    %v147 = vld [vmem:[#allocation2 + $0x1e8] sm:$0xff]
    %v148 = vld [vmem:[#allocation2 + $0x1f0] sm:$0xff]
    %v149 = vld [vmem:[#allocation2 + $0x1f8] sm:$0xff]
    %v150 = vld [vmem:[#allocation2 + $0x200] sm:$0xff]
    %v151 = vld [vmem:[#allocation2 + $0x208] sm:$0xff]
    %v152 = vld [vmem:[#allocation2 + $0x210] sm:$0xff]
    %v153 = vld [vmem:[#allocation2 + $0x218] sm:$0xff]
    %v154 = vld [vmem:[#allocation2 + $0x220] sm:$0xff]
    %v155 = vld [vmem:[#allocation2 + $0x228] sm:$0xff]
    %v156 = vld [vmem:[#allocation2 + $0x230] sm:$0xff]
    %v157 = vld [vmem:[#allocation2 + $0x238] sm:$0xff]
    %v158 = vld [vmem:[#allocation2 + $0x240] sm:$0xff]
    %v159 = vld [vmem:[#allocation2 + $0x248] sm:$0xff]
    %v160 = vld [vmem:[#allocation2 + $0x250] sm:$0xff]
    %v161 = vld [vmem:[#allocation2 + $0x258] sm:$0xff]
    %v162 = vld [vmem:[#allocation2 + $0x260] sm:$0xff]
    %v163 = vld [vmem:[#allocation2 + $0x268] sm:$0xff]
    %v164 = vld [vmem:[#allocation2 + $0x270] sm:$0xff]
    %v165 = vld [vmem:[#allocation2 + $0x278] sm:$0xff]
    %v166 = vld [vmem:[#allocation2 + $0x280] sm:$0xff]
    %v167 = vld [vmem:[#allocation2 + $0x288] sm:$0xff]
    %v168 = vld [vmem:[#allocation2 + $0x290] sm:$0xff]
    %v169 = vld [vmem:[#allocation2 + $0x298] sm:$0xff]
    %v170 = vld [vmem:[#allocation2 + $0x2a0] sm:$0xff]
    %v171 = vld [vmem:[#allocation2 + $0x2a8] sm:$0xff]
    %v172 = vld [vmem:[#allocation2 + $0x2b0] sm:$0xff]
    %v173 = vld [vmem:[#allocation2 + $0x2b8] sm:$0xff]
    %v174 = vld [vmem:[#allocation2 + $0x2c0] sm:$0xff]
    %v175 = vld [vmem:[#allocation2 + $0x2c8] sm:$0xff]
    %v176 = vld [vmem:[#allocation2 + $0x2d0] sm:$0xff]
    %v177 = vld [vmem:[#allocation2 + $0x2d8] sm:$0xff]
    %v178 = vld [vmem:[#allocation2 + $0x2e0] sm:$0xff]
    %v179 = vld [vmem:[#allocation2 + $0x2e8] sm:$0xff]
    %v180 = vld [vmem:[#allocation2 + $0x2f0] sm:$0xff]
    %v181 = vld [vmem:[#allocation2 + $0x2f8] sm:$0xff]
    %v182 = vld [vmem:[#allocation2 + $0x300] sm:$0xff]
    %v183 = vld [vmem:[#allocation2 + $0x308] sm:$0xff]
    %v184 = vld [vmem:[#allocation4] sm:$0x3]
    %v186 = vperm.slane %v184, 0
    %v187 = vperm.slane %v184, 1
    %v198 = vunpack.c.l.b16 %v78
    %v199 = vunpack.c.h.b16 %v78
    %v200 = vunpack.c.l.b16 %v79
    %v201 = vunpack.c.h.b16 %v79
    %v202 = vunpack.c.l.b16 %v80
    %v203 = vunpack.c.h.b16 %v80
    %v204 = vunpack.c.l.b16 %v81
    %v205 = vunpack.c.l.b16 %v82
    %v206 = vunpack.c.h.b16 %v82
    %v207 = vunpack.c.l.b16 %v83
    %v208 = vunpack.c.h.b16 %v83
    %v209 = vunpack.c.l.b16 %v84
    %v210 = vunpack.c.h.b16 %v84
    %v211 = vunpack.c.l.b16 %v85
    %v212 = vpack.c.b16 %v205, %v198
    %v213 = vpack.c.b16 %v206, %v199
    %v214 = vpack.c.b16 %v207, %v200
    %v215 = vpack.c.b16 %v208, %v201
    %v216 = vpack.c.b16 %v209, %v202
    %v217 = vpack.c.b16 %v210, %v203
    %v218 = vpack.c.b16 %v211, %v204
    %v323 = vunpack.c.l.b16 %v86
    %v324 = vunpack.c.h.b16 %v86
    %v325 = vunpack.c.l.b16 %v87
    %v326 = vunpack.c.h.b16 %v87
    %v327 = vunpack.c.l.b16 %v88
    %v328 = vunpack.c.h.b16 %v88
    %v329 = vunpack.c.l.b16 %v89
    %v330 = vunpack.c.h.b16 %v89
    %v331 = vunpack.c.l.b16 %v90
    %v332 = vunpack.c.h.b16 %v90
    %v333 = vunpack.c.l.b16 %v91
    %v334 = vunpack.c.h.b16 %v91
    %v335 = vunpack.c.l.b16 %v92
    %v336 = vunpack.c.h.b16 %v92
    %v337 = vunpack.c.l.b16 %v93
    %v338 = vunpack.c.h.b16 %v93
    %v339 = vunpack.c.l.b16 %v94
    %v340 = vunpack.c.h.b16 %v94
    %v341 = vunpack.c.l.b16 %v95
    %v342 = vunpack.c.h.b16 %v95
    %v343 = vunpack.c.l.b16 %v96
    %v344 = vunpack.c.h.b16 %v96
    %v345 = vunpack.c.l.b16 %v97
    %v346 = vunpack.c.h.b16 %v97
    %v347 = vunpack.c.l.b16 %v98
    %v348 = vunpack.c.h.b16 %v98
    %v349 = vunpack.c.l.b16 %v99
    %v350 = vunpack.c.h.b16 %v99
    %v351 = vunpack.c.l.b16 %v100
    %v352 = vunpack.c.h.b16 %v100
    %v353 = vunpack.c.l.b16 %v101
    %v354 = vunpack.c.h.b16 %v101
    %v355 = vunpack.c.l.b16 %v102
    %v356 = vunpack.c.h.b16 %v102
    %v357 = vunpack.c.l.b16 %v103
    %v358 = vunpack.c.h.b16 %v103
    %v359 = vunpack.c.l.b16 %v104
    %v360 = vunpack.c.h.b16 %v104
    %v361 = vunpack.c.l.b16 %v105
    %v362 = vunpack.c.h.b16 %v105
    %v363 = vunpack.c.l.b16 %v106
    %v364 = vunpack.c.h.b16 %v106
    %v365 = vunpack.c.l.b16 %v107
    %v366 = vunpack.c.h.b16 %v107
    %v367 = vunpack.c.l.b16 %v108
    %v368 = vunpack.c.h.b16 %v108
    %v369 = vunpack.c.l.b16 %v109
    %v370 = vunpack.c.h.b16 %v109
    %v371 = vunpack.c.l.b16 %v110
    %v372 = vunpack.c.h.b16 %v110
    %v373 = vunpack.c.l.b16 %v111
    %v374 = vunpack.c.h.b16 %v111
    %v375 = vunpack.c.l.b16 %v112
    %v376 = vunpack.c.h.b16 %v112
    %v377 = vunpack.c.l.b16 %v113
    %v378 = vunpack.c.h.b16 %v113
    %v379 = vunpack.c.l.b16 %v114
    %v380 = vunpack.c.h.b16 %v114
    %v381 = vunpack.c.l.b16 %v115
    %v382 = vunpack.c.h.b16 %v115
    %v383 = vunpack.c.l.b16 %v116
    %v384 = vunpack.c.h.b16 %v116
    %v385 = vunpack.c.l.b16 %v117
    %v386 = vunpack.c.h.b16 %v117
    %v387 = vunpack.c.l.b16 %v118
    %v388 = vunpack.c.h.b16 %v118
    %v389 = vunpack.c.l.b16 %v119
    %v390 = vunpack.c.h.b16 %v119
    %v391 = vunpack.c.l.b16 %v120
    %v392 = vunpack.c.h.b16 %v120
    %v393 = vunpack.c.l.b16 %v121
    %v394 = vunpack.c.h.b16 %v121
    %v395 = vunpack.c.l.b16 %v122
    %v396 = vunpack.c.h.b16 %v122
    %v397 = vunpack.c.l.b16 %v123
    %v398 = vunpack.c.h.b16 %v123
    %v399 = vunpack.c.l.b16 %v124
    %v400 = vunpack.c.h.b16 %v124
    %v401 = vunpack.c.l.b16 %v125
    %v402 = vunpack.c.h.b16 %v125
    %v403 = vunpack.c.l.b16 %v126
    %v404 = vunpack.c.h.b16 %v126
    %v405 = vunpack.c.l.b16 %v127
    %v406 = vunpack.c.h.b16 %v127
    %v407 = vunpack.c.l.b16 %v128
    %v408 = vunpack.c.h.b16 %v128
    %v409 = vunpack.c.l.b16 %v129
    %v410 = vunpack.c.h.b16 %v129
    %v411 = vunpack.c.l.b16 %v130
    %v412 = vunpack.c.h.b16 %v130
    %v413 = vunpack.c.l.b16 %v131
    %v414 = vunpack.c.h.b16 %v131
    %v415 = vunpack.c.l.b16 %v132
    %v416 = vunpack.c.h.b16 %v132
    %v417 = vunpack.c.l.b16 %v133
    %v418 = vunpack.c.h.b16 %v133
    %v419 = vunpack.c.l.b16 %v134
    %v420 = vunpack.c.h.b16 %v134
    %v421 = vunpack.c.l.b16 %v135
    %v422 = vunpack.c.h.b16 %v135
    %v423 = vunpack.c.l.b16 %v136
    %v424 = vunpack.c.h.b16 %v136
    %v425 = vunpack.c.l.b16 %v137
    %v426 = vunpack.c.h.b16 %v137
    %v427 = vunpack.c.l.b16 %v138
    %v428 = vunpack.c.h.b16 %v138
    %v429 = vunpack.c.l.b16 %v139
    %v430 = vunpack.c.h.b16 %v139
    %v431 = vunpack.c.l.b16 %v140
    %v432 = vunpack.c.h.b16 %v140
    %v433 = vunpack.c.l.b16 %v141
    %v434 = vunpack.c.h.b16 %v141
    %v435 = vunpack.c.l.b16 %v142
    %v436 = vunpack.c.h.b16 %v142
    %v437 = vunpack.c.l.b16 %v143
    %v438 = vunpack.c.h.b16 %v143
    %v439 = vunpack.c.l.b16 %v144
    %v440 = vunpack.c.h.b16 %v144
    %v441 = vunpack.c.l.b16 %v145
    %v442 = vunpack.c.h.b16 %v145
    %v443 = vunpack.c.l.b16 %v146
    %v444 = vunpack.c.h.b16 %v146
    %v445 = vunpack.c.l.b16 %v147
    %v446 = vunpack.c.h.b16 %v147
    %v447 = vunpack.c.l.b16 %v148
    %v448 = vunpack.c.h.b16 %v148
    %v449 = vunpack.c.l.b16 %v149
    %v450 = vunpack.c.h.b16 %v149
    %v451 = vunpack.c.l.b16 %v150
    %v452 = vunpack.c.h.b16 %v150
    %v453 = vunpack.c.l.b16 %v151
    %v454 = vunpack.c.h.b16 %v151
    %v455 = vunpack.c.l.b16 %v152
    %v456 = vunpack.c.h.b16 %v152
    %v457 = vunpack.c.l.b16 %v153
    %v458 = vunpack.c.h.b16 %v153
    %v459 = vunpack.c.l.b16 %v154
    %v460 = vunpack.c.h.b16 %v154
    %v461 = vunpack.c.l.b16 %v155
    %v462 = vunpack.c.h.b16 %v155
    %v463 = vunpack.c.l.b16 %v156
    %v464 = vunpack.c.h.b16 %v156
    %v465 = vunpack.c.l.b16 %v157
    %v466 = vunpack.c.h.b16 %v157
    %v467 = vunpack.c.l.b16 %v158
    %v468 = vunpack.c.h.b16 %v158
    %v469 = vunpack.c.l.b16 %v159
    %v470 = vunpack.c.h.b16 %v159
    %v471 = vunpack.c.l.b16 %v160
    %v472 = vunpack.c.h.b16 %v160
    %v473 = vunpack.c.l.b16 %v161
    %v474 = vunpack.c.h.b16 %v161
    %v475 = vunpack.c.l.b16 %v162
    %v476 = vunpack.c.h.b16 %v162
    %v477 = vunpack.c.l.b16 %v163
    %v478 = vunpack.c.h.b16 %v163
    %v479 = vunpack.c.l.b16 %v164
    %v480 = vunpack.c.h.b16 %v164
    %v481 = vunpack.c.l.b16 %v165
    %v482 = vunpack.c.h.b16 %v165
    %v483 = vunpack.c.l.b16 %v166
    %v484 = vunpack.c.h.b16 %v166
    %v485 = vunpack.c.l.b16 %v167
    %v486 = vunpack.c.h.b16 %v167
    %v487 = vunpack.c.l.b16 %v168
    %v488 = vunpack.c.h.b16 %v168
    %v489 = vunpack.c.l.b16 %v169
    %v490 = vunpack.c.h.b16 %v169
    %v491 = vunpack.c.l.b16 %v170
    %v492 = vunpack.c.h.b16 %v170
    %v493 = vunpack.c.l.b16 %v171
    %v494 = vunpack.c.h.b16 %v171
    %v495 = vunpack.c.l.b16 %v172
    %v496 = vunpack.c.h.b16 %v172
    %v497 = vunpack.c.l.b16 %v173
    %v498 = vunpack.c.h.b16 %v173
    %v499 = vunpack.c.l.b16 %v174
    %v500 = vunpack.c.h.b16 %v174
    %v501 = vunpack.c.l.b16 %v175
    %v502 = vunpack.c.h.b16 %v175
    %v503 = vunpack.c.l.b16 %v176
    %v504 = vunpack.c.h.b16 %v176
    %v505 = vunpack.c.l.b16 %v177
    %v506 = vunpack.c.h.b16 %v177
    %v507 = vunpack.c.l.b16 %v178
    %v508 = vunpack.c.h.b16 %v178
    %v509 = vunpack.c.l.b16 %v179
    %v510 = vunpack.c.h.b16 %v179
    %v511 = vunpack.c.l.b16 %v180
    %v512 = vunpack.c.h.b16 %v180
    %v513 = vunpack.c.l.b16 %v181
    %v514 = vunpack.c.h.b16 %v181
    %v515 = vunpack.c.l.b16 %v182
    %v516 = vunpack.c.h.b16 %v182
    %v517 = vunpack.c.l.b16 %v183
    %v518 = vunpack.c.h.b16 %v183
    %v519 = vpack.c.b16 %v325, %v323
    %v520 = vpack.c.b16 %v326, %v324
    %v521 = vpack.c.b16 %v329, %v327
    %v522 = vpack.c.b16 %v330, %v328
    %v523 = vpack.c.b16 %v333, %v331
    %v524 = vpack.c.b16 %v334, %v332
    %v525 = vpack.c.b16 %v337, %v335
    %v526 = vpack.c.b16 %v338, %v336
    %v527 = vpack.c.b16 %v341, %v339
    %v528 = vpack.c.b16 %v342, %v340
    %v529 = vpack.c.b16 %v345, %v343
    %v530 = vpack.c.b16 %v346, %v344
    %v531 = vpack.c.b16 %v349, %v347
    %v532 = vpack.c.b16 %v350, %v348
    %v533 = vpack.c.b16 %v353, %v351
    %v534 = vpack.c.b16 %v354, %v352
    %v535 = vpack.c.b16 %v357, %v355
    %v536 = vpack.c.b16 %v358, %v356
    %v537 = vpack.c.b16 %v361, %v359
    %v538 = vpack.c.b16 %v362, %v360
    %v539 = vpack.c.b16 %v365, %v363
    %v540 = vpack.c.b16 %v366, %v364
    %v541 = vpack.c.b16 %v369, %v367
    %v542 = vpack.c.b16 %v370, %v368
    %v543 = vpack.c.b16 %v373, %v371
    %v544 = vpack.c.b16 %v374, %v372
    %v545 = vpack.c.b16 %v377, %v375
    %v546 = vpack.c.b16 %v378, %v376
    %v547 = vpack.c.b16 %v381, %v379
    %v548 = vpack.c.b16 %v382, %v380
    %v549 = vpack.c.b16 %v385, %v383
    %v550 = vpack.c.b16 %v386, %v384
    %v551 = vpack.c.b16 %v389, %v387
    %v552 = vpack.c.b16 %v390, %v388
    %v553 = vpack.c.b16 %v393, %v391
    %v554 = vpack.c.b16 %v394, %v392
    %v555 = vpack.c.b16 %v397, %v395
    %v556 = vpack.c.b16 %v398, %v396
    %v557 = vpack.c.b16 %v401, %v399
    %v558 = vpack.c.b16 %v402, %v400
    %v559 = vpack.c.b16 %v405, %v403
    %v560 = vpack.c.b16 %v406, %v404
    %v561 = vpack.c.b16 %v409, %v407
    %v562 = vpack.c.b16 %v410, %v408
    %v563 = vpack.c.b16 %v413, %v411
    %v564 = vpack.c.b16 %v414, %v412
    %v565 = vpack.c.b16 %v417, %v415
    %v566 = vpack.c.b16 %v418, %v416
    %v567 = vpack.c.b16 %v421, %v419
    %v568 = vpack.c.b16 %v422, %v420
    %v569 = vpack.c.b16 %v425, %v423
    %v570 = vpack.c.b16 %v426, %v424
    %v571 = vpack.c.b16 %v429, %v427
    %v572 = vpack.c.b16 %v430, %v428
    %v573 = vpack.c.b16 %v433, %v431
    %v574 = vpack.c.b16 %v434, %v432
    %v575 = vpack.c.b16 %v437, %v435
    %v576 = vpack.c.b16 %v438, %v436
    %v577 = vpack.c.b16 %v441, %v439
    %v578 = vpack.c.b16 %v442, %v440
    %v579 = vpack.c.b16 %v445, %v443
    %v580 = vpack.c.b16 %v446, %v444
    %v581 = vpack.c.b16 %v449, %v447
    %v582 = vpack.c.b16 %v450, %v448
    %v583 = vpack.c.b16 %v453, %v451
    %v584 = vpack.c.b16 %v454, %v452
    %v585 = vpack.c.b16 %v457, %v455
    %v586 = vpack.c.b16 %v458, %v456
    %v587 = vpack.c.b16 %v461, %v459
    %v588 = vpack.c.b16 %v462, %v460
    %v589 = vpack.c.b16 %v465, %v463
    %v590 = vpack.c.b16 %v466, %v464
    %v591 = vpack.c.b16 %v469, %v467
    %v592 = vpack.c.b16 %v470, %v468
    %v593 = vpack.c.b16 %v473, %v471
    %v594 = vpack.c.b16 %v474, %v472
    %v595 = vpack.c.b16 %v477, %v475
    %v596 = vpack.c.b16 %v478, %v476
    %v597 = vpack.c.b16 %v481, %v479
    %v598 = vpack.c.b16 %v482, %v480
    %v599 = vpack.c.b16 %v485, %v483
    %v600 = vpack.c.b16 %v486, %v484
    %v601 = vpack.c.b16 %v489, %v487
    %v602 = vpack.c.b16 %v490, %v488
    %v603 = vpack.c.b16 %v493, %v491
    %v604 = vpack.c.b16 %v494, %v492
    %v605 = vpack.c.b16 %v497, %v495
    %v606 = vpack.c.b16 %v498, %v496
    %v607 = vpack.c.b16 %v501, %v499
    %v608 = vpack.c.b16 %v502, %v500
    %v609 = vpack.c.b16 %v505, %v503
    %v610 = vpack.c.b16 %v506, %v504
    %v611 = vpack.c.b16 %v509, %v507
    %v612 = vpack.c.b16 %v510, %v508
    %v613 = vpack.c.b16 %v513, %v511
    %v614 = vpack.c.b16 %v514, %v512
    %v615 = vpack.c.b16 %v517, %v515
    %v616 = vpack.c.b16 %v518, %v516
    %vm715 = vcmask 130048
    %v717 = vsel %vm715, %v218, 0
    %719 = vmatpush.bf16.msra.mxu0 %v533
    %720 = vmatpush.bf16.msra.mxu0 %v531
    %721 = vmatpush.bf16.msra.mxu0 %v529
    %722 = vmatpush.bf16.msra.mxu0 %v527
    %723 = vmatpush.bf16.msra.mxu0 %v525
    %724 = vmatpush.bf16.msra.mxu0 %v523
    %725 = vmatpush.bf16.msra.mxu0 %v521
    %726 = vmatpush.bf16.msra.mxu0 %v519
    %727 = vmatmul.bf16.gmra.mxu0 %v212
    %v728 = vpop.f32.mrf.mxu0
    %v729 = vadd.f32 %v186, %v728
    %v730 = vpop.f32.mrf.mxu0
    %v731 = vadd.f32 %v186, %v730
    %732 = vdwg.mxu0
    %733 = vmatpush.bf16.msra.mxu0 %v549
    %734 = vmatpush.bf16.msra.mxu0 %v547
    %735 = vmatpush.bf16.msra.mxu0 %v545
    %736 = vmatpush.bf16.msra.mxu0 %v543
    %737 = vmatpush.bf16.msra.mxu0 %v541
    %738 = vmatpush.bf16.msra.mxu0 %v539
    %739 = vmatpush.bf16.msra.mxu0 %v537
    %740 = vmatpush.bf16.msra.mxu0 %v535
    %741 = vmatmul.bf16.gmra.mxu0 %v213
    %v742 = vpop.f32.mrf.mxu0
    %v743 = vadd.f32 %v729, %v742
    %v744 = vpop.f32.mrf.mxu0
    %v745 = vadd.f32 %v731, %v744
    %746 = vdwg.mxu0
    %747 = vmatpush.bf16.msra.mxu0 %v565
    %748 = vmatpush.bf16.msra.mxu0 %v563
    %749 = vmatpush.bf16.msra.mxu0 %v561
    %750 = vmatpush.bf16.msra.mxu0 %v559
    %751 = vmatpush.bf16.msra.mxu0 %v557
    %752 = vmatpush.bf16.msra.mxu0 %v555
    %753 = vmatpush.bf16.msra.mxu0 %v553
    %754 = vmatpush.bf16.msra.mxu0 %v551
    %755 = vmatmul.bf16.gmra.mxu0 %v214
    %v756 = vpop.f32.mrf.mxu0
    %v757 = vadd.f32 %v743, %v756
    %v758 = vpop.f32.mrf.mxu0
    %v759 = vadd.f32 %v745, %v758
    %760 = vdwg.mxu0
    %761 = vmatpush.bf16.msra.mxu0 %v581
    %762 = vmatpush.bf16.msra.mxu0 %v579
    %763 = vmatpush.bf16.msra.mxu0 %v577
    %764 = vmatpush.bf16.msra.mxu0 %v575
    %765 = vmatpush.bf16.msra.mxu0 %v573
    %766 = vmatpush.bf16.msra.mxu0 %v571
    %767 = vmatpush.bf16.msra.mxu0 %v569
    %768 = vmatpush.bf16.msra.mxu0 %v567
    %769 = vmatmul.bf16.gmra.mxu0 %v215
    %v770 = vpop.f32.mrf.mxu0
    %v771 = vadd.f32 %v757, %v770
    %v772 = vpop.f32.mrf.mxu0
    %v773 = vadd.f32 %v759, %v772
    %774 = vdwg.mxu0
    %775 = vmatpush.bf16.msra.mxu0 %v597
    %776 = vmatpush.bf16.msra.mxu0 %v595
    %777 = vmatpush.bf16.msra.mxu0 %v593
    %778 = vmatpush.bf16.msra.mxu0 %v591
    %779 = vmatpush.bf16.msra.mxu0 %v589
    %780 = vmatpush.bf16.msra.mxu0 %v587
    %781 = vmatpush.bf16.msra.mxu0 %v585
    %782 = vmatpush.bf16.msra.mxu0 %v583
    %783 = vmatmul.bf16.gmra.mxu0 %v216
    %v784 = vpop.f32.mrf.mxu0
    %v785 = vadd.f32 %v771, %v784
    %v786 = vpop.f32.mrf.mxu0
    %v787 = vadd.f32 %v773, %v786
    %788 = vdwg.mxu0
    %789 = vmatpush.bf16.msra.mxu0 %v613
    %790 = vmatpush.bf16.msra.mxu0 %v611
    %791 = vmatpush.bf16.msra.mxu0 %v609
    %792 = vmatpush.bf16.msra.mxu0 %v607
    %793 = vmatpush.bf16.msra.mxu0 %v605
    %794 = vmatpush.bf16.msra.mxu0 %v603
    %795 = vmatpush.bf16.msra.mxu0 %v601
    %796 = vmatpush.bf16.msra.mxu0 %v599
    %797 = vmatmul.bf16.gmra.mxu0 %v217
    %v798 = vpop.f32.mrf.mxu0
    %v799 = vadd.f32 %v785, %v798
    %v800 = vpop.f32.mrf.mxu0
    %v801 = vadd.f32 %v787, %v800
    %802 = vdwg.mxu0
    %803 = vmatpush.bf16.msra.mxu0 0
    %804 = vmatpush.bf16.msra.mxu0 0
    %805 = vmatpush.bf16.msra.mxu0 0
    %806 = vmatpush.bf16.msra.mxu0 0
    %807 = vmatpush.bf16.msra.mxu0 0
    %808 = vmatpush.bf16.msra.mxu0 0
    %809 = vmatpush.bf16.msra.mxu0 0
    %810 = vmatpush.bf16.msra.mxu0 %v615
    %811 = vmatmul.bf16.gmra.mxu0 %v717
    %v812 = vpop.f32.mrf.mxu0
    %v813 = vadd.f32 %v799, %v812
    %v814 = vpop.f32.mrf.mxu0
    %v815 = vadd.f32 %v801, %v814
    %816 = vdwg.mxu0
    %817 = vmatpush.bf16.msra.mxu0 %v534
    %818 = vmatpush.bf16.msra.mxu0 %v532
    %819 = vmatpush.bf16.msra.mxu0 %v530
    %820 = vmatpush.bf16.msra.mxu0 %v528
    %821 = vmatpush.bf16.msra.mxu0 %v526
    %822 = vmatpush.bf16.msra.mxu0 %v524
    %823 = vmatpush.bf16.msra.mxu0 %v522
    %824 = vmatpush.bf16.msra.mxu0 %v520
    %825 = vmatmul.bf16.gmra.mxu0 %v212
    %v826 = vpop.f32.mrf.mxu0
    %v827 = vadd.f32 %v187, %v826
    %v828 = vpop.f32.mrf.mxu0
    %v829 = vadd.f32 %v187, %v828
    %830 = vdwg.mxu0
    %831 = vmatpush.bf16.msra.mxu0 %v550
    %832 = vmatpush.bf16.msra.mxu0 %v548
    %833 = vmatpush.bf16.msra.mxu0 %v546
    %834 = vmatpush.bf16.msra.mxu0 %v544
    %835 = vmatpush.bf16.msra.mxu0 %v542
    %836 = vmatpush.bf16.msra.mxu0 %v540
    %837 = vmatpush.bf16.msra.mxu0 %v538
    %838 = vmatpush.bf16.msra.mxu0 %v536
    %839 = vmatmul.bf16.gmra.mxu0 %v213
    %v840 = vpop.f32.mrf.mxu0
    %v841 = vadd.f32 %v827, %v840
    %v842 = vpop.f32.mrf.mxu0
    %v843 = vadd.f32 %v829, %v842
    %844 = vdwg.mxu0
    %845 = vmatpush.bf16.msra.mxu0 %v566
    %846 = vmatpush.bf16.msra.mxu0 %v564
    %847 = vmatpush.bf16.msra.mxu0 %v562
    %848 = vmatpush.bf16.msra.mxu0 %v560
    %849 = vmatpush.bf16.msra.mxu0 %v558
    %850 = vmatpush.bf16.msra.mxu0 %v556
    %851 = vmatpush.bf16.msra.mxu0 %v554
    %852 = vmatpush.bf16.msra.mxu0 %v552
    %853 = vmatmul.bf16.gmra.mxu0 %v214
    %v854 = vpop.f32.mrf.mxu0
    %v855 = vadd.f32 %v841, %v854
    %v856 = vpop.f32.mrf.mxu0
    %v857 = vadd.f32 %v843, %v856
    %858 = vdwg.mxu0
    %859 = vmatpush.bf16.msra.mxu0 %v582
    %860 = vmatpush.bf16.msra.mxu0 %v580
    %861 = vmatpush.bf16.msra.mxu0 %v578
    %862 = vmatpush.bf16.msra.mxu0 %v576
    %863 = vmatpush.bf16.msra.mxu0 %v574
    %864 = vmatpush.bf16.msra.mxu0 %v572
    %865 = vmatpush.bf16.msra.mxu0 %v570
    %866 = vmatpush.bf16.msra.mxu0 %v568
    %867 = vmatmul.bf16.gmra.mxu0 %v215
    %v868 = vpop.f32.mrf.mxu0
    %v869 = vadd.f32 %v855, %v868
    %v870 = vpop.f32.mrf.mxu0
    %v871 = vadd.f32 %v857, %v870
    %872 = vdwg.mxu0
    %873 = vmatpush.bf16.msra.mxu0 %v598
    %874 = vmatpush.bf16.msra.mxu0 %v596
    %875 = vmatpush.bf16.msra.mxu0 %v594
    %876 = vmatpush.bf16.msra.mxu0 %v592
    %877 = vmatpush.bf16.msra.mxu0 %v590
    %878 = vmatpush.bf16.msra.mxu0 %v588
    %879 = vmatpush.bf16.msra.mxu0 %v586
    %880 = vmatpush.bf16.msra.mxu0 %v584
    %881 = vmatmul.bf16.gmra.mxu0 %v216
    %v882 = vpop.f32.mrf.mxu0
    %v883 = vadd.f32 %v869, %v882
    %v884 = vpop.f32.mrf.mxu0
    %v885 = vadd.f32 %v871, %v884
    %886 = vdwg.mxu0
    %887 = vmatpush.bf16.msra.mxu0 %v614
    %888 = vmatpush.bf16.msra.mxu0 %v612
    %889 = vmatpush.bf16.msra.mxu0 %v610
    %890 = vmatpush.bf16.msra.mxu0 %v608
    %891 = vmatpush.bf16.msra.mxu0 %v606
    %892 = vmatpush.bf16.msra.mxu0 %v604
    %893 = vmatpush.bf16.msra.mxu0 %v602
    %894 = vmatpush.bf16.msra.mxu0 %v600
    %895 = vmatmul.bf16.gmra.mxu0 %v217
    %v896 = vpop.f32.mrf.mxu0
    %v897 = vadd.f32 %v883, %v896
    %v898 = vpop.f32.mrf.mxu0
    %v899 = vadd.f32 %v885, %v898
    %900 = vdwg.mxu0
    %901 = vmatpush.bf16.msra.mxu0 0
    %902 = vmatpush.bf16.msra.mxu0 0
    %903 = vmatpush.bf16.msra.mxu0 0
    %904 = vmatpush.bf16.msra.mxu0 0
    %905 = vmatpush.bf16.msra.mxu0 0
    %906 = vmatpush.bf16.msra.mxu0 0
    %907 = vmatpush.bf16.msra.mxu0 0
    %908 = vmatpush.bf16.msra.mxu0 %v616
    %909 = vmatmul.bf16.gmra.mxu0 %v717
    %v910 = vpop.f32.mrf.mxu0
    %v911 = vadd.f32 %v897, %v910
    %v912 = vpop.f32.mrf.mxu0
    %v913 = vadd.f32 %v899, %v912
    %914 = vdwg.mxu0
    %v915 = vmax.f32 %v813, 0.0
    %v916 = vmax.f32 %v911, 0.0
    %v917 = vmax.f32 %v815, 0.0
    %v918 = vmax.f32 %v913, 0.0
    %v919 = vpack.c.bf16 %v917, %v915
    %v920 = vpack.c.bf16 %v918, %v916
    %v921 = vld [vmem:[%s3] sm:$0xf]
    %v922 = vld [vmem:[%s3 + $0x4] sm:$0xf]
    %v923 = vld [vmem:[%s3 + $0x8] sm:$0xf]
    %v924 = vld [vmem:[%s3 + $0xc] sm:$0xf]
    %v925 = vld [vmem:[%s3 + $0x10] sm:$0xf]
    %v926 = vld [vmem:[%s3 + $0x14] sm:$0xf]
    %v927 = vld [vmem:[%s3 + $0x18] sm:$0xf]
    %v928 = vld [vmem:[%s3 + $0x1c] sm:$0xf]
    %v929 = vld [vmem:[%s3 + $0x20] sm:$0xf]
    %v930 = vld [vmem:[%s3 + $0x24] sm:$0xf]
    %v931 = vld [vmem:[%s3 + $0x28] sm:$0xf]
    %v932 = vld [vmem:[%s3 + $0x2c] sm:$0xf]
    %v933 = vld [vmem:[%s3 + $0x30] sm:$0xf]
    %v934 = vld [vmem:[%s3 + $0x34] sm:$0xf]
    %v935 = vld [vmem:[%s3 + $0x38] sm:$0xf]
    %v936 = vld [vmem:[%s3 + $0x3c] sm:$0xf]
    %v937 = vld [vmem:[%s3 + $0x40] sm:$0xf]
    %v938 = vld [vmem:[%s3 + $0x44] sm:$0xf]
    %v939 = vld [vmem:[%s3 + $0x48] sm:$0xf]
    %v940 = vld [vmem:[%s3 + $0x4c] sm:$0xf]
    %v941 = vld [vmem:[%s3 + $0x50] sm:$0xf]
    %v942 = vld [vmem:[%s3 + $0x54] sm:$0xf]
    %v943 = vld [vmem:[%s3 + $0x58] sm:$0xf]
    %v944 = vld [vmem:[%s3 + $0x5c] sm:$0xf]
    %v945 = vld [vmem:[%s3 + $0x60] sm:$0xf]
    %v946 = vld [vmem:[%s3 + $0x64] sm:$0xf]
    %v947 = vld [vmem:[%s3 + $0x68] sm:$0xf]
    %v948 = vld [vmem:[%s3 + $0x6c] sm:$0xf]
    %v949 = vld [vmem:[%s3 + $0x70] sm:$0xf]
    %v950 = vld [vmem:[%s3 + $0x74] sm:$0xf]
    %v951 = vld [vmem:[%s3 + $0x78] sm:$0xf]
    %v952 = vld [vmem:[%s3 + $0x7c] sm:$0xf]
    %v953 = vld [vmem:[%s4] sm:$0x1]
    %v955 = vperm.slane %v953, 0
    %v989 = vunpack.c.l.b16 %v921
    %v990 = vunpack.c.l.b16 %v922
    %v991 = vunpack.c.l.b16 %v923
    %v992 = vunpack.c.l.b16 %v924
    %v993 = vunpack.c.l.b16 %v925
    %v994 = vunpack.c.l.b16 %v926
    %v995 = vunpack.c.l.b16 %v927
    %v996 = vunpack.c.l.b16 %v928
    %v997 = vunpack.c.l.b16 %v929
    %v998 = vunpack.c.l.b16 %v930
    %v999 = vunpack.c.l.b16 %v931
    %v1000 = vunpack.c.l.b16 %v932
    %v1001 = vunpack.c.l.b16 %v933
    %v1002 = vunpack.c.l.b16 %v934
    %v1003 = vunpack.c.l.b16 %v935
    %v1004 = vunpack.c.l.b16 %v936
    %v1005 = vunpack.c.l.b16 %v937
    %v1006 = vunpack.c.l.b16 %v938
    %v1007 = vunpack.c.l.b16 %v939
    %v1008 = vunpack.c.l.b16 %v940
    %v1009 = vunpack.c.l.b16 %v941
    %v1010 = vunpack.c.l.b16 %v942
    %v1011 = vunpack.c.l.b16 %v943
    %v1012 = vunpack.c.l.b16 %v944
    %v1013 = vunpack.c.l.b16 %v945
    %v1014 = vunpack.c.l.b16 %v946
    %v1015 = vunpack.c.l.b16 %v947
    %v1016 = vunpack.c.l.b16 %v948
    %v1017 = vunpack.c.l.b16 %v949
    %v1018 = vunpack.c.l.b16 %v950
    %v1019 = vunpack.c.l.b16 %v951
    %v1020 = vunpack.c.l.b16 %v952
    %v1021 = vpack.c.b16 %v990, %v989
    %v1022 = vpack.c.b16 %v992, %v991
    %v1023 = vpack.c.b16 %v994, %v993
    %v1024 = vpack.c.b16 %v996, %v995
    %v1025 = vpack.c.b16 %v998, %v997
    %v1026 = vpack.c.b16 %v1000, %v999
    %v1027 = vpack.c.b16 %v1002, %v1001
    %v1028 = vpack.c.b16 %v1004, %v1003
    %v1029 = vpack.c.b16 %v1006, %v1005
    %v1030 = vpack.c.b16 %v1008, %v1007
    %v1031 = vpack.c.b16 %v1010, %v1009
    %v1032 = vpack.c.b16 %v1012, %v1011
    %v1033 = vpack.c.b16 %v1014, %v1013
    %v1034 = vpack.c.b16 %v1016, %v1015
    %v1035 = vpack.c.b16 %v1018, %v1017
    %v1036 = vpack.c.b16 %v1020, %v1019
    %1053 = vmatpush.bf16.msra.mxu0 %v1028
    %1054 = vmatpush.bf16.msra.mxu0 %v1027
    %1055 = vmatpush.bf16.msra.mxu0 %v1026
    %1056 = vmatpush.bf16.msra.mxu0 %v1025
    %1057 = vmatpush.bf16.msra.mxu0 %v1024
    %1058 = vmatpush.bf16.msra.mxu0 %v1023
    %1059 = vmatpush.bf16.msra.mxu0 %v1022
    %1060 = vmatpush.bf16.msra.mxu0 %v1021
    %1061 = vmatmul.bf16.gmra.mxu0 %v919
    %v1062 = vpop.f32.mrf.mxu0
    %v1063 = vadd.f32 %v955, %v1062
    %v1064 = vpop.f32.mrf.mxu0
    %v1065 = vadd.f32 %v955, %v1064
    %1066 = vdwg.mxu0
    %1067 = vmatpush.bf16.msra.mxu0 %v1036
    %1068 = vmatpush.bf16.msra.mxu0 %v1035
    %1069 = vmatpush.bf16.msra.mxu0 %v1034
    %1070 = vmatpush.bf16.msra.mxu0 %v1033
    %1071 = vmatpush.bf16.msra.mxu0 %v1032
    %1072 = vmatpush.bf16.msra.mxu0 %v1031
    %1073 = vmatpush.bf16.msra.mxu0 %v1030
    %1074 = vmatpush.bf16.msra.mxu0 %v1029
    %1075 = vmatmul.bf16.gmra.mxu0 %v920
    %v1076 = vpop.f32.mrf.mxu0
    %v1077 = vadd.f32 %v1063, %v1076
    %v1078 = vpop.f32.mrf.mxu0
    %v1079 = vadd.f32 %v1065, %v1078
    %1080 = vdwg.mxu0
    %v1081 = vmax.f32 %v1077, 0.0
    %v1082 = vmax.f32 %v1079, 0.0
    %v1083 = vpack.c.bf16 %v1082, %v1081
    %v1084 = vld [vmem:[%s5] sm:$0xf]
    %v1085 = vld [vmem:[%s5 + $0x4] sm:$0xf]
    %v1086 = vld [vmem:[%s5 + $0x8] sm:$0xf]
    %v1087 = vld [vmem:[%s5 + $0xc] sm:$0xf]
    %v1088 = vld [vmem:[%s5 + $0x10] sm:$0xf]
    %v1089 = vld [vmem:[%s5 + $0x14] sm:$0xf]
    %v1090 = vld [vmem:[%s5 + $0x18] sm:$0xf]
    %v1091 = vld [vmem:[%s5 + $0x1c] sm:$0xf]
    %v1092 = vld [vmem:[%s5 + $0x20] sm:$0xf]
    %v1093 = vld [vmem:[%s5 + $0x24] sm:$0xf]
    %v1094 = vld [vmem:[%s5 + $0x28] sm:$0xf]
    %v1095 = vld [vmem:[%s5 + $0x2c] sm:$0xf]
    %v1096 = vld [vmem:[%s5 + $0x30] sm:$0xf]
    %v1097 = vld [vmem:[%s5 + $0x34] sm:$0xf]
    %v1098 = vld [vmem:[%s5 + $0x38] sm:$0xf]
    %v1099 = vld [vmem:[%s5 + $0x3c] sm:$0xf]
    %v1100 = vld [vmem:[%s6] sm:$0x1]
    %v1102 = vperm.slane %v1100, 0
    %v1120 = vunpack.c.l.b16 %v1084
    %v1121 = vunpack.c.l.b16 %v1085
    %v1122 = vunpack.c.l.b16 %v1086
    %v1123 = vunpack.c.l.b16 %v1087
    %v1124 = vunpack.c.l.b16 %v1088
    %v1125 = vunpack.c.l.b16 %v1089
    %v1126 = vunpack.c.l.b16 %v1090
    %v1127 = vunpack.c.l.b16 %v1091
    %v1128 = vunpack.c.l.b16 %v1092
    %v1129 = vunpack.c.l.b16 %v1093
    %v1130 = vunpack.c.l.b16 %v1094
    %v1131 = vunpack.c.l.b16 %v1095
    %v1132 = vunpack.c.l.b16 %v1096
    %v1133 = vunpack.c.l.b16 %v1097
    %v1134 = vunpack.c.l.b16 %v1098
    %v1135 = vunpack.c.l.b16 %v1099
    %v1136 = vpack.c.b16 %v1121, %v1120
    %v1137 = vpack.c.b16 %v1123, %v1122
    %v1138 = vpack.c.b16 %v1125, %v1124
    %v1139 = vpack.c.b16 %v1127, %v1126
    %v1140 = vpack.c.b16 %v1129, %v1128
    %v1141 = vpack.c.b16 %v1131, %v1130
    %v1142 = vpack.c.b16 %v1133, %v1132
    %v1143 = vpack.c.b16 %v1135, %v1134
    %1152 = vmatpush.bf16.msra.mxu0 %v1143
    %1153 = vmatpush.bf16.msra.mxu0 %v1142
    %1154 = vmatpush.bf16.msra.mxu0 %v1141
    %1155 = vmatpush.bf16.msra.mxu0 %v1140
    %1156 = vmatpush.bf16.msra.mxu0 %v1139
    %1157 = vmatpush.bf16.msra.mxu0 %v1138
    %1158 = vmatpush.bf16.msra.mxu0 %v1137
    %1159 = vmatpush.bf16.msra.mxu0 %v1136
    %1160 = vmatmul.bf16.gmra.mxu0 %v1083
    %v1161 = vpop.f32.mrf.mxu0
    %v1162 = vadd.f32 %v1102, %v1161
    %v1163 = vpop.f32.mrf.mxu0
    %v1164 = vadd.f32 %v1102, %v1163
    %1165 = vdwg.mxu0
    %v1166 = vmax.f32 %v1162, 0.0
    %v1167 = vmax.f32 %v1164, 0.0
    %v1168 = vpack.c.bf16 %v1167, %v1166
    %v1169 = vld [vmem:[#allocation6] sm:$0xf]
    %v1170 = vld [vmem:[#allocation6 + $0x4] sm:$0xf]
    %v1171 = vld [vmem:[#allocation6 + $0x8] sm:$0xf]
    %v1172 = vld [vmem:[#allocation6 + $0xc] sm:$0xf]
    %v1173 = vld [vmem:[#allocation6 + $0x10] sm:$0xf]
    %v1174 = vld [vmem:[#allocation6 + $0x14] sm:$0xf]
    %v1175 = vld [vmem:[#allocation6 + $0x18] sm:$0xf]
    %v1176 = vld [vmem:[#allocation6 + $0x1c] sm:$0xf]
    %v1177 = vld [vmem:[#allocation6 + $0x20] sm:$0xf]
    %v1178 = vld [vmem:[#allocation6 + $0x24] sm:$0xf]
    %v1179 = vld [vmem:[#allocation6 + $0x28] sm:$0xf]
    %v1180 = vld [vmem:[#allocation6 + $0x2c] sm:$0xf]
    %v1181 = vld [vmem:[#allocation6 + $0x30] sm:$0xf]
    %v1182 = vld [vmem:[#allocation6 + $0x34] sm:$0xf]
    %v1183 = vld [vmem:[#allocation6 + $0x38] sm:$0xf]
    %v1184 = vld [vmem:[#allocation6 + $0x3c] sm:$0xf]
    %v1185 = vld [vmem:[%s8] sm:$0x1]
    %v1187 = vperm.slane %v1185, 0
    %v1205 = vunpack.c.l.b16 %v1169
    %v1206 = vunpack.c.l.b16 %v1170
    %v1207 = vunpack.c.l.b16 %v1171
    %v1208 = vunpack.c.l.b16 %v1172
    %v1209 = vunpack.c.l.b16 %v1173
    %v1210 = vunpack.c.l.b16 %v1174
    %v1211 = vunpack.c.l.b16 %v1175
    %v1212 = vunpack.c.l.b16 %v1176
    %v1213 = vunpack.c.l.b16 %v1177
    %v1214 = vunpack.c.l.b16 %v1178
    %v1215 = vunpack.c.l.b16 %v1179
    %v1216 = vunpack.c.l.b16 %v1180
    %v1217 = vunpack.c.l.b16 %v1181
    %v1218 = vunpack.c.l.b16 %v1182
    %v1219 = vunpack.c.l.b16 %v1183
    %v1220 = vunpack.c.l.b16 %v1184
    %v1221 = vpack.c.b16 %v1206, %v1205
    %v1222 = vpack.c.b16 %v1208, %v1207
    %v1223 = vpack.c.b16 %v1210, %v1209
    %v1224 = vpack.c.b16 %v1212, %v1211
    %v1225 = vpack.c.b16 %v1214, %v1213
    %v1226 = vpack.c.b16 %v1216, %v1215
    %v1227 = vpack.c.b16 %v1218, %v1217
    %v1228 = vpack.c.b16 %v1220, %v1219
    %1237 = vmatpush.bf16.msra.mxu0 %v1228
    %1238 = vmatpush.bf16.msra.mxu0 %v1227
    %1239 = vmatpush.bf16.msra.mxu0 %v1226
    %1240 = vmatpush.bf16.msra.mxu0 %v1225
    %1241 = vmatpush.bf16.msra.mxu0 %v1224
    %1242 = vmatpush.bf16.msra.mxu0 %v1223
    %1243 = vmatpush.bf16.msra.mxu0 %v1222
    %1244 = vmatpush.bf16.msra.mxu0 %v1221
    %1245 = vmatmul.bf16.gmra.mxu0 %v1168
    %v1246 = vpop.f32.mrf.mxu0
    %v1247 = vadd.f32 %v1187, %v1246
    %v1248 = vpop.f32.mrf.mxu0
    %v1249 = vadd.f32 %v1187, %v1248
    %1250 = vdwg.mxu0
    %1251 = vst [vmem:[%s9] sm:$0xff] %v1247
    %1252 = vst [vmem:[%s9 + $0x8] sm:$0xff] %v1249
    // Predicated region
    $region50: #{mlp_forward.1} parent=1 // pred_check
      _
    $region51: #{mlp_forward.1} parent=1 // pred_check_branch
      %1254 = sbr.rel (0) target = $region53
    $region52: #{mlp_forward.1} parent=1 // pred_region
      _
    $region53: #{mlp_forward.1} parent=1 // pred_fallthru
      _
    // Predicated region
    $region54: #{mlp_forward.1} parent=1 // pred_check
      _
    $region55: #{mlp_forward.1} parent=1 // pred_check_branch
      %1256 = sbr.rel (0) target = $region57
    $region56: #{mlp_forward.1} parent=1 // pred_region
      _
    $region57: #{mlp_forward.1} parent=1 // pred_fallthru
      _
    %1257 = vsyncpa [#allocation3], 1
    %1258 = vsyncpa [#allocation5], 1

</llo_original>
